<compile_context>
chip_gen: v7x
topology: tpu7x:2x2x1
jax: 0.10.0
libtpu: 0.0.40
codegen_flags: <defaults>
</compile_context>

<pallas_src>
import functools
import math

import jax
import jax.numpy as jnp
from jax.experimental import pallas as pl
from jax.experimental.pallas import tpu as pltpu

BN_EPS = 1e-5


def _round_up(v, m):
    return (v + m - 1) // m * m


def linear_block_kernel(x_ref, w_ref, gamma_ref, beta_ref, o_ref, acc_ref, *, b_true):
    """One (n_tile, k_tile) grid step of ReLU(BN(x @ W^T)) with K accumulation."""
    k = pl.program_id(1)

    @pl.when(k == 0)
    def _init():
        acc_ref[...] = jnp.zeros_like(acc_ref)

    # MXU matmul: bf16 inputs, f32 accumulation.
    acc_ref[...] += jnp.dot(
        x_ref[...], w_ref[...], preferred_element_type=jnp.float32
    )

    @pl.when(k == pl.num_programs(1) - 1)
    def _epilogue():
        y = acc_ref[...]  # (B_pad, tn) f32
        inv_b = 1.0 / b_true
        # Padded batch rows (>= b_true) are exactly zero (zero inputs, no bias),
        # so they contribute nothing to the sum; mask them out of the variance.
        row_mask = (
            jax.lax.broadcasted_iota(jnp.int32, y.shape, 0) < b_true
        ).astype(jnp.float32)
        mean = jnp.sum(y, axis=0, keepdims=True) * inv_b
        centered = (y - mean) * row_mask
        var = jnp.sum(centered * centered, axis=0, keepdims=True) * inv_b
        # Fold gamma into the normalization scale (rsqrt goes to the EUP slot).
        scale = gamma_ref[...] * jax.lax.rsqrt(var + BN_EPS)
        o_ref[...] = jnp.maximum(centered * scale + beta_ref[...], 0.0).astype(
            o_ref.dtype
        )


def linear_block_forward(x, w_t, gamma, beta, *, tn=512, tk=1024):
    """LinearBlock forward.

    x     : (B, C, H, W) float32 (NCHW, flattened like torch x.view(B, -1))
    w_t   : (D, N) Linear weight, pre-transposed (D = C*H*W)
    gamma : (N,) BatchNorm2d weight
    beta  : (N,) BatchNorm2d bias
    Returns (B, N) float32.

    The Linear bias is intentionally NOT taken: under train-mode BatchNorm the
    per-channel batch-mean subtraction cancels it exactly (dead compute / DMA).
    """
    B = x.shape[0]
    D = int(math.prod(x.shape[1:]))
    N = w_t.shape[1]
    assert w_t.shape[0] == D

    # ---- padding for TPU layouts ------------------------------------------
    B_pad = _round_up(max(B, 1), 8)                       # f32 sublane count
    tk = _round_up(min(tk, _round_up(D, 128)), 128)       # lane-multiple K tile
    tn = _round_up(min(tn, _round_up(N, 128)), 128)       # lane-dense N tile
    D_pad = _round_up(D, tk)
    N_pad = _round_up(N, tn)

    x_flat = x.reshape(B, D)                              # == torch x.view(B, -1)
    x_p = jnp.zeros((B_pad, D_pad), jnp.bfloat16).at[:B, :D].set(
        x_flat.astype(jnp.bfloat16)
    )
    w_p = jnp.zeros((D_pad, N_pad), jnp.bfloat16).at[:D, :N].set(
        w_t.astype(jnp.bfloat16)
    )
    gamma_p = jnp.zeros((1, N_pad), jnp.float32).at[0, :N].set(
        gamma.astype(jnp.float32)
    )
    beta_p = jnp.zeros((1, N_pad), jnp.float32).at[0, :N].set(
        beta.astype(jnp.float32)
    )

    grid = (N_pad // tn, D_pad // tk)

    # VMEM budget: double-buffered input/output tiles + resident accumulator,
    # with 2x headroom, capped well below v7x's 64 MiB physical VMEM.
    vmem_bytes = (
        2 * (B_pad * tk * 2)      # x tiles (bf16, double-buffered)
        + 2 * (tk * tn * 2)       # w tiles (bf16, double-buffered)
        + 4 * (tn * 4)            # gamma/beta tiles (f32)
        + 2 * (B_pad * tn * 4)    # output tiles (f32, double-buffered)
        + (B_pad * tn * 4)        # accumulator scratch (f32)
    )
    vmem_limit = int(min(max(2 * vmem_bytes, 4 * 1024 * 1024), 48 * 1024 * 1024))

    kernel = functools.partial(linear_block_kernel, b_true=B)

    out = pl.pallas_call(
        kernel,
        out_shape=jax.ShapeDtypeStruct((B_pad, N_pad), jnp.float32),
        grid_spec=pltpu.PrefetchScalarGridSpec(
            num_scalar_prefetch=0,
            grid=grid,
            in_specs=[
                pl.BlockSpec((B_pad, tk), lambda n, k: (0, k)),   # x
                pl.BlockSpec((tk, tn), lambda n, k: (k, n)),      # w_t
                pl.BlockSpec((1, tn), lambda n, k: (0, n)),       # gamma
                pl.BlockSpec((1, tn), lambda n, k: (0, n)),       # beta
            ],
            out_specs=pl.BlockSpec((B_pad, tn), lambda n, k: (0, n)),
            scratch_shapes=[pltpu.VMEM((B_pad, tn), jnp.float32)],
        ),
        compiler_params=pltpu.CompilerParams(
            dimension_semantics=("parallel", "arbitrary"),
            vmem_limit_bytes=vmem_limit,
        ),
        cost_estimate=pl.CostEstimate(
            flops=2 * B_pad * D_pad * N_pad,
            transcendentals=0,
            bytes_accessed=(
                B_pad * D_pad * 2 + D_pad * N_pad * 2 + B_pad * N_pad * 4
            ),
        ),
    )(x_p, w_p, gamma_p, beta_p)

    return out[:B, :N]


def reference_forward(x, w_t, bias, gamma, beta):
    """Pure-JAX replica of the PyTorch module in train mode.

    Uses the same bf16 rounding of the matmul inputs as the kernel's MXU path
    (f32 accumulation and f32 BN stats).  The Linear bias IS applied here, to
    confirm that dropping it inside the kernel is exact under train-mode BN.
    """
    B = x.shape[0]
    x_flat = x.reshape(B, -1)
    y = jnp.dot(
        x_flat.astype(jnp.bfloat16),
        w_t.astype(jnp.bfloat16),
        preferred_element_type=jnp.float32,
    ) + bias
    mean = jnp.mean(y, axis=0, keepdims=True)
    var = jnp.mean((y - mean) ** 2, axis=0, keepdims=True)
    y = (y - mean) * jax.lax.rsqrt(var + BN_EPS)
    y = y * gamma + beta
    return jnp.maximum(y, 0.0)


if __name__ == "__main__":
    # Small shapes consistent with the module.
    batch = 2
    in_planes = 4
    input_sz = 16
    out_planes = 32
    D = in_planes * input_sz * input_sz  # 1024

    key = jax.random.PRNGKey(0)
    kx, kw, kb, kg, kbeta = jax.random.split(key, 5)

    x = jax.random.normal(kx, (batch, in_planes, input_sz, input_sz), jnp.float32)

    # nn.Linear(D, out_planes) weight, stored pre-transposed as (D, N).
    w_t = jax.random.normal(kw, (D, out_planes), jnp.float32) * (1.0 / jnp.sqrt(D))
    bias = jax.random.normal(kb, (out_planes,), jnp.float32) * 0.01
    # BatchNorm2d affine params (perturbed so the affine path is exercised).
    gamma = 1.0 + 0.1 * jax.random.normal(kg, (out_planes,), jnp.float32)
    beta = 0.1 * jax.random.normal(kbeta, (out_planes,), jnp.float32)

    # Small tiles so the K-reduction grid (4 steps) and the pipeline are
    # actually exercised at these toy shapes; defaults (tk=1024, tn=512) are
    # for production-sized D, N.
    out = linear_block_forward(x, w_t, gamma, beta, tn=128, tk=256)
    out = jax.block_until_ready(out)

    ref = reference_forward(x, w_t, bias, gamma, beta)
    assert out.shape == (batch, out_planes)
    assert jnp.allclose(out, ref, atol=1e-3, rtol=1e-3), "mismatch vs reference"

    print("KERNEL_OK")
</pallas_src>

<mosaic_0001>
module attributes {stable_mosaic.version = 11 : i64} {
  func.func @linear_block_kernel(%arg0: i32, %arg1: i32, %arg2: memref<8x256xbf16, #tpu.memory_space<vmem>>, %arg3: memref<256x128xbf16, #tpu.memory_space<vmem>>, %arg4: memref<1x128xf32, #tpu.memory_space<vmem>>, %arg5: memref<1x128xf32, #tpu.memory_space<vmem>>, %arg6: memref<8x128xf32, #tpu.memory_space<vmem>>, %arg7: memref<8x128xf32, #tpu.memory_space<vmem>>) attributes {dimension_semantics = [#tpu.dimension_semantics<parallel>, #tpu.dimension_semantics<arbitrary>], iteration_bounds = array<i64: 1, 4>, scalar_prefetch = 0 : i64, scratch_operands = 1 : i64, tpu.core_type = #tpu.core_type<tc>, window_params = [{transform_indices = @transform_0, window_bounds = array<i64: 8, 256>}, {transform_indices = @transform_1, window_bounds = array<i64: 256, 128>}, {transform_indices = @transform_2, window_bounds = array<i64: 1, 128>}, {transform_indices = @transform_3, window_bounds = array<i64: 1, 128>}, {transform_indices = @transform_4, window_bounds = array<i64: 8, 128>}]} {
    %c0_i32 = arith.constant 0 : i32
    %0 = arith.cmpi eq, %arg1, %c0_i32 : i32
    %1 = arith.extui %0 : i1 to i32
    %c0_i32_0 = arith.constant 0 : i32
    %2 = arith.cmpi ne, %1, %c0_i32_0 : i32
    scf.if %2 {
      %cst_9 = arith.constant 0.000000e+00 : f32
      %12 = vector.broadcast %cst_9 : f32 to vector<8x128xf32>
      %c0_10 = arith.constant 0 : index
      %c0_11 = arith.constant 0 : index
      %13 = vector.load %arg7[%c0_10, %c0_11] : memref<8x128xf32, #tpu.memory_space<vmem>>, vector<8x128xf32>
      tpu.vector_store %arg7[%c0_10, %c0_11], %12 {strides = array<i32>} : memref<8x128xf32, #tpu.memory_space<vmem>>, vector<8x128xf32>,
    } else {
    }
    %c0 = arith.constant 0 : index
    %c0_1 = arith.constant 0 : index
    %3 = vector.load %arg7[%c0, %c0_1] : memref<8x128xf32, #tpu.memory_space<vmem>>, vector<8x128xf32>
    %c0_2 = arith.constant 0 : index
    %c0_3 = arith.constant 0 : index
    %4 = vector.load %arg2[%c0_2, %c0_3] : memref<8x256xbf16, #tpu.memory_space<vmem>>, vector<8x256xbf16>
    %c0_4 = arith.constant 0 : index
    %c0_5 = arith.constant 0 : index
    %5 = vector.load %arg3[%c0_4, %c0_5] : memref<256x128xbf16, #tpu.memory_space<vmem>>, vector<256x128xbf16>
    %cst = arith.constant dense<0.000000e+00> : vector<8x128xf32>
    %6 = tpu.matmul %4, %5, %cst {dimension_numbers = #tpu.dot_dimension_numbers<[1], [0], [0], [1], [0, 0, 1, 1], [], []>} : vector<8x256xbf16>, vector<256x128xbf16>, vector<8x128xf32> -> vector<8x128xf32>
    %7 = arith.addf %3, %6 : vector<8x128xf32>
    %c0_6 = arith.constant 0 : index
    %c0_7 = arith.constant 0 : index
    %8 = vector.load %arg7[%c0_6, %c0_7] : memref<8x128xf32, #tpu.memory_space<vmem>>, vector<8x128xf32>
    tpu.vector_store %arg7[%c0_6, %c0_7], %7 {strides = array<i32>} : memref<8x128xf32, #tpu.memory_space<vmem>>, vector<8x128xf32>,
    %c3_i32 = arith.constant 3 : i32
    %9 = arith.cmpi eq, %arg1, %c3_i32 : i32
    %10 = arith.extui %9 : i1 to i32
    %c0_i32_8 = arith.constant 0 : i32
    %11 = arith.cmpi ne, %10, %c0_i32_8 : i32
    scf.if %11 {
      %c0_9 = arith.constant 0 : index
      %c0_10 = arith.constant 0 : index
      %12 = vector.load %arg7[%c0_9, %c0_10] : memref<8x128xf32, #tpu.memory_space<vmem>>, vector<8x128xf32>
      %13 = tpu.iota {dimensions = array<i32: 0>} : vector<8x128xi32>
      %c2_i32 = arith.constant 2 : i32
      %14 = vector.broadcast %c2_i32 : i32 to vector<8x128xi32>
      %15 = arith.cmpi slt, %13, %14 : vector<8x128xi32>
      %16 = arith.extui %15 : vector<8x128xi1> to vector<8x128xi32>
      %17 = arith.sitofp %16 : vector<8x128xi32> to vector<8x128xf32>
      %cst_11 = arith.constant dense<0.000000e+00> : vector<128xf32>
      %18 = vector.multi_reduction <add>, %12, %cst_11 [0] : vector<8x128xf32> to vector<128xf32>
      %19 = vector.shape_cast %18 : vector<128xf32> to vector<1x128xf32>
      %cst_12 = arith.constant 5.000000e-01 : f32
      %20 = vector.broadcast %cst_12 : f32 to vector<1x128xf32>
      %21 = arith.mulf %19, %20 : vector<1x128xf32>
      %22 = vector.broadcast %21 : vector<1x128xf32> to vector<8x128xf32>
      %23 = arith.subf %12, %22 : vector<8x128xf32>
      %24 = arith.mulf %23, %17 : vector<8x128xf32>
      %25 = arith.mulf %24, %24 : vector<8x128xf32>
      %cst_13 = arith.constant dense<0.000000e+00> : vector<128xf32>
      %26 = vector.multi_reduction <add>, %25, %cst_13 [0] : vector<8x128xf32> to vector<128xf32>
      %27 = vector.shape_cast %26 : vector<128xf32> to vector<1x128xf32>
      %cst_14 = arith.constant 5.000000e-01 : f32
      %28 = vector.broadcast %cst_14 : f32 to vector<1x128xf32>
      %29 = arith.mulf %27, %28 : vector<1x128xf32>
      %c0_15 = arith.constant 0 : index
      %c0_16 = arith.constant 0 : index
      %30 = vector.load %arg4[%c0_15, %c0_16] : memref<1x128xf32, #tpu.memory_space<vmem>>, vector<1x128xf32>
      %cst_17 = arith.constant 9.99999974E-6 : f32
      %31 = vector.broadcast %cst_17 : f32 to vector<1x128xf32>
      %32 = arith.addf %29, %31 : vector<1x128xf32>
      %33 = math.rsqrt %32 : vector<1x128xf32>
      %34 = arith.mulf %30, %33 : vector<1x128xf32>
      %35 = vector.broadcast %34 : vector<1x128xf32> to vector<8x128xf32>
      %36 = arith.mulf %24, %35 : vector<8x128xf32>
      %c0_18 = arith.constant 0 : index
      %c0_19 = arith.constant 0 : index
      %37 = vector.load %arg5[%c0_18, %c0_19] : memref<1x128xf32, #tpu.memory_space<vmem>>, vector<1x128xf32>
      %38 = vector.broadcast %37 : vector<1x128xf32> to vector<8x128xf32>
      %39 = arith.addf %36, %38 : vector<8x128xf32>
      %cst_20 = arith.constant 0.000000e+00 : f32
      %40 = vector.broadcast %cst_20 : f32 to vector<8x128xf32>
      %41 = arith.maximumf %39, %40 : vector<8x128xf32>
      %c0_21 = arith.constant 0 : index
      %c0_22 = arith.constant 0 : index
      %42 = vector.load %arg6[%c0_21, %c0_22] : memref<8x128xf32, #tpu.memory_space<vmem>>, vector<8x128xf32>
      tpu.vector_store %arg6[%c0_21, %c0_22], %41 {strides = array<i32>} : memref<8x128xf32, #tpu.memory_space<vmem>>, vector<8x128xf32>,
    } else {
    }
    return
  }
  func.func @transform_0(%arg0: i32, %arg1: i32) -> (i32, i32) {
    %c0_i32 = arith.constant 0 : i32
    %c0_i32_0 = arith.constant 0 : i32
    return %c0_i32, %arg1 : i32, i32
  }
  func.func @transform_1(%arg0: i32, %arg1: i32) -> (i32, i32) {
    %c0_i32 = arith.constant 0 : i32
    return %arg1, %arg0 : i32, i32
  }
  func.func @transform_2(%arg0: i32, %arg1: i32) -> (i32, i32) {
    %c0_i32 = arith.constant 0 : i32
    %c0_i32_0 = arith.constant 0 : i32
    return %c0_i32, %arg0 : i32, i32
  }
  func.func @transform_3(%arg0: i32, %arg1: i32) -> (i32, i32) {
    %c0_i32 = arith.constant 0 : i32
    %c0_i32_0 = arith.constant 0 : i32
    return %c0_i32, %arg0 : i32, i32
  }
  func.func @transform_4(%arg0: i32, %arg1: i32) -> (i32, i32) {
    %c0_i32 = arith.constant 0 : i32
    %c0_i32_0 = arith.constant 0 : i32
    return %c0_i32, %arg0 : i32, i32
  }
}

</mosaic_0001>

<llo_original>
// kernel: tpu_custom_call.1
$region0: #{tpu_custom_call.1}
  #allocation0 [shape = 'u32[]', space=smem, size = 0x4, offset = 0x4, fixed_abs, tag = 'smem constant byte address 0x4 - core index']
  #allocation1 [shape = 'u32[144,128]{1,0:T(1,128)}', space=vmem, size = 0x12000, scoped, tag = 'internal scratch']
  #allocation2 [shape = 'f32[8,128]{1,0:T(8,128)}', space=vmem, size = 0x1000, scoped, tag = 'scratch operand']
  %s0 = inlined_call_operand.hbm [shape: bf16[8,1024], index: 0, kind: input, shape index: {}]
  %s1 = inlined_call_operand.hbm [shape: bf16[1024,128], index: 1, kind: input, shape index: {}]
  %s2 = inlined_call_operand.vmem [shape: f32[1,128], index: 2, kind: input, shape index: {}]
  %s3 = inlined_call_operand.vmem [shape: f32[1,128], index: 3, kind: input, shape index: {}]
  %s4 = inlined_call_operand.hbm [shape: f32[8,128], index: 4, kind: output, shape index: {}]
  %s5 = sld [smem:[#allocation0]]
  $region65: #{tpu_custom_call.1} parent=0
    _
  %s7 = ssub.s32 1, %s5
  %s8 = scalar_select 0, %s7, %s5
  $region1: #{tpu_custom_call.1} parent=0
    #allocation3 [shape = 'u8[8192]{0}', space=vmem, size = 0x2000, scoped, tag = 'input window, operand 0']
    #allocation4 [shape = 's32[2]{0}', space=sflag, size = 0x8, scoped, tag = 'scoped memory for tpu_custom_call.1']
    #allocation5 [shape = 's32[2]{0}', space=sflag, size = 0x8, scoped, tag = 'scoped memory for tpu_custom_call.1']
    #allocation6 [shape = 'u8[131072]{0}', space=vmem, size = 0x20000, scoped, tag = 'input window, operand 1']
    #allocation7 [shape = 's32[2]{0}', space=sflag, size = 0x8, scoped, tag = 'scoped memory for tpu_custom_call.1']
    #allocation8 [shape = 'u8[4096]{0}', space=vmem, size = 0x1000, scoped, tag = 'output window, operand 0, single buffered']
    %9 = vsyncpa [#allocation4], 0
    %s10 = scalar_lea.sflag [#allocation4], 1
    %11 = vsyncpa %s10, 0
    %12 = vsyncpa [#allocation7], 0
    %s13 = scalar_lea.sflag [#allocation7], 1
    %14 = vsyncpa %s13, 0
    %15 = vsyncpa [#allocation5], 0
    loop: start=0, step=1, limit=6
    $region2: #{tpu_custom_call.1} parent=1 // loop_pre_header
      _
    $region3: #{tpu_custom_call.1} parent=1 // loop_header
      %s17 = sphi 0, %s21
      %p18 = scmp.ge.s32.totalorder %s17, 6
      %s24 = sphi 0, %s36
      %s25 = sphi 0, %s32
      %s26 = sphi 0, %s24
      %s27 = sphi 0, %s25
      %s28 = sphi 0, %s26
      %s29 = sphi 0, %s27
      %s39 = sphi 0, %s41
      %s42 = sphi 0, %s39
      %s43 = sphi 0, %s42
      %s59 = sphi 0, %s43
      %s67 = sphi 0, %s69
      %s70 = sphi 0, %s67
      %s71 = sphi 0, %s70
      %s87 = sphi 0, %s71
      %s93 = sphi 0, %s95
      %s96 = sphi 0, %s93
      %s97 = sphi 0, %s96
      %s113 = sphi 0, %s97
      %s119 = sphi 0, %s121
      %s122 = sphi 0, %s119
      %s123 = sphi 0, %s122
      %s139 = sphi 0, %s123
      %s145 = sphi 0, %s147
      %s148 = sphi 0, %s145
      %s149 = sphi 0, %s148
      %s165 = sphi 0, %s149
    $region4: #{tpu_custom_call.1} parent=1 // loop_header_branch
      %20 = sbr.rel (%p18) target = $region8
    $region5: #{tpu_custom_call.1} parent=1 // loop_body
      %s22 = ssub.s32 %s17, 1
      %s23 = ssub.s32 %s17, 2
      %s30 = sadd.s32 1, %s25
      %p31 = scmp.ge.s32.totalorder %s30, 4
      %s32 = scalar_select %p31, 0, %s30
      %s33 = sadd.s32 1, %s24
      %s34 = scalar_select %p31, %s33, %s24
      %p35 = scmp.ge.s32.totalorder %s34, 1
      %s36 = scalar_select %p35, 0, %s34
      %s37 = ssub.s32 %s25, %s32
      %p38 = scmp.eq.s32.totalorder %s37, 0
      %s40 = sadd.s32 %s39, 1
      %s41 = scalar_select %p38, %s39, %s40
      %p44 = pneg %p38
      %p45 = scmp.eq.s32.totalorder %s17, 3
      %p46 = por %p44, %p45
      %p47 = scmp.ne.s32.totalorder %s39, %s42
      %p48 = scmp.eq.s32.totalorder %s17, 0
      %p49 = por %p47, %p48
      %p50 = scmp.ne.s32.totalorder %s39, %s42
      %p51 = scmp.eq.s32.totalorder %s22, 3
      %p52 = por %p50, %p51
      %p53 = scmp.ne.s32.totalorder %s42, %s43
      %p54 = scmp.eq.s32.totalorder %s22, 0
      %p55 = por %p53, %p54
      %p56 = scmp.ne.s32.totalorder %s42, %s43
      %p57 = scmp.eq.s32.totalorder %s23, 3
      %p58 = por %p56, %p57
      %p60 = scmp.ne.s32.totalorder %s43, %s59
      %p61 = scmp.eq.s32.totalorder %s23, 0
      %p62 = por %p60, %p61
      %s63 = ssub.s32 %s25, %s32
      %s64 = ssub.s32 %s24, %s36
      %s65 = sor.u32 %s63, %s64
      %p66 = scmp.eq.s32.totalorder %s65, 0
      %s68 = sadd.s32 %s67, 1
      %s69 = scalar_select %p66, %s67, %s68
      %p72 = pneg %p66
      %p73 = scmp.eq.s32.totalorder %s17, 3
      %p74 = por %p72, %p73
      %p75 = scmp.ne.s32.totalorder %s67, %s70
      %p76 = scmp.eq.s32.totalorder %s17, 0
      %p77 = por %p75, %p76
      %p78 = scmp.ne.s32.totalorder %s67, %s70
      %p79 = scmp.eq.s32.totalorder %s22, 3
      %p80 = por %p78, %p79
      %p81 = scmp.ne.s32.totalorder %s70, %s71
      %p82 = scmp.eq.s32.totalorder %s22, 0
      %p83 = por %p81, %p82
      %p84 = scmp.ne.s32.totalorder %s70, %s71
      %p85 = scmp.eq.s32.totalorder %s23, 3
      %p86 = por %p84, %p85
      %p88 = scmp.ne.s32.totalorder %s71, %s87
      %p89 = scmp.eq.s32.totalorder %s23, 0
      %p90 = por %p88, %p89
      %s91 = ssub.s32 %s24, %s36
      %p92 = scmp.eq.s32.totalorder %s91, 0
      %s94 = sadd.s32 %s93, 1
      %s95 = scalar_select %p92, %s93, %s94
      %p98 = pneg %p92
      %p99 = scmp.eq.s32.totalorder %s17, 3
      %p100 = por %p98, %p99
      %p101 = scmp.ne.s32.totalorder %s93, %s96
      %p102 = scmp.eq.s32.totalorder %s17, 0
      %p103 = por %p101, %p102
      %p104 = scmp.ne.s32.totalorder %s93, %s96
      %p105 = scmp.eq.s32.totalorder %s22, 3
      %p106 = por %p104, %p105
      %p107 = scmp.ne.s32.totalorder %s96, %s97
      %p108 = scmp.eq.s32.totalorder %s22, 0
      %p109 = por %p107, %p108
      %p110 = scmp.ne.s32.totalorder %s96, %s97
      %p111 = scmp.eq.s32.totalorder %s23, 3
      %p112 = por %p110, %p111
      %p114 = scmp.ne.s32.totalorder %s97, %s113
      %p115 = scmp.eq.s32.totalorder %s23, 0
      %p116 = por %p114, %p115
      %s117 = ssub.s32 %s24, %s36
      %p118 = scmp.eq.s32.totalorder %s117, 0
      %s120 = sadd.s32 %s119, 1
      %s121 = scalar_select %p118, %s119, %s120
      %p124 = pneg %p118
      %p125 = scmp.eq.s32.totalorder %s17, 3
      %p126 = por %p124, %p125
      %p127 = scmp.ne.s32.totalorder %s119, %s122
      %p128 = scmp.eq.s32.totalorder %s17, 0
      %p129 = por %p127, %p128
      %p130 = scmp.ne.s32.totalorder %s119, %s122
      %p131 = scmp.eq.s32.totalorder %s22, 3
      %p132 = por %p130, %p131
      %p133 = scmp.ne.s32.totalorder %s122, %s123
      %p134 = scmp.eq.s32.totalorder %s22, 0
      %p135 = por %p133, %p134
      %p136 = scmp.ne.s32.totalorder %s122, %s123
      %p137 = scmp.eq.s32.totalorder %s23, 3
      %p138 = por %p136, %p137
      %p140 = scmp.ne.s32.totalorder %s123, %s139
      %p141 = scmp.eq.s32.totalorder %s23, 0
      %p142 = por %p140, %p141
      %s143 = ssub.s32 %s24, %s36
      %p144 = scmp.eq.s32.totalorder %s143, 0
      %s146 = sadd.s32 %s145, 1
      %s147 = scalar_select %p144, %s145, %s146
      %p150 = pneg %p144
      %p151 = scmp.eq.s32.totalorder %s17, 3
      %p152 = por %p150, %p151
      %p153 = scmp.ne.s32.totalorder %s145, %s148
      %p154 = scmp.eq.s32.totalorder %s17, 0
      %p155 = por %p153, %p154
      %p156 = scmp.ne.s32.totalorder %s145, %s148
      %p157 = scmp.eq.s32.totalorder %s22, 3
      %p158 = por %p156, %p157
      %p159 = scmp.ne.s32.totalorder %s148, %s149
      %p160 = scmp.eq.s32.totalorder %s22, 0
      %p161 = por %p159, %p160
      %p162 = scmp.ne.s32.totalorder %s148, %s149
      %p163 = scmp.eq.s32.totalorder %s23, 3
      %p164 = por %p162, %p163
      %p166 = scmp.ne.s32.totalorder %s149, %s165
      %p167 = scmp.eq.s32.totalorder %s23, 0
      %p168 = por %p166, %p167
      %p169 = scmp.le.s32.totalorder 1, %s17
      %p170 = scmp.lt.s32.totalorder %s17, 5
      %p171 = pnand %p169, %p170
      %p172 = pneg %p171
      // Predicated region
      $region9: #{tpu_custom_call.1} parent=5 // pred_check
        _
      $region10: #{tpu_custom_call.1} parent=5 // pred_check_branch
        %174 = sbr.rel (%p171) target = $region12
      $region11: #{tpu_custom_call.1} parent=5 // pred_region
        %s175 = ssub.s32 %s17, 1
        // Predicated region
        $region13: #{tpu_custom_call.1} parent=11 // pred_check
          %p176 = pneg %p109
        $region14: #{tpu_custom_call.1} parent=11 // pred_check_branch
          %178 = sbr.rel (%p176) target = $region16
        $region15: #{tpu_custom_call.1} parent=11 // pred_region
          %p179 = scmp.lt.s32.totalorder %s26, 0
          %s180 = scalar_select %p179, %s26, 0
          %s181 = scalar_lea.vmem %s2, %s180
        $region16: #{tpu_custom_call.1} parent=11 // pred_fallthru
          _
        // Predicated region
        $region17: #{tpu_custom_call.1} parent=11 // pred_check
          %p182 = pneg %p135
        $region18: #{tpu_custom_call.1} parent=11 // pred_check_branch
          %184 = sbr.rel (%p182) target = $region20
        $region19: #{tpu_custom_call.1} parent=11 // pred_region
          %p185 = scmp.lt.s32.totalorder %s26, 0
          %s186 = scalar_select %p185, %s26, 0
          %s187 = scalar_lea.vmem %s3, %s186
        $region20: #{tpu_custom_call.1} parent=11 // pred_fallthru
          _
      $region12: #{tpu_custom_call.1} parent=5 // pred_fallthru
        _
      %p188 = scmp.lt.s32.totalorder %s17, 4
      // Predicated region
      $region21: #{tpu_custom_call.1} parent=5 // pred_check
        %p189 = pneg %p188
      $region22: #{tpu_custom_call.1} parent=5 // pred_check_branch
        %191 = sbr.rel (%p189) target = $region24
      $region23: #{tpu_custom_call.1} parent=5 // pred_region
        // Predicated region
        $region25: #{tpu_custom_call.1} parent=23 // pred_check
          %p192 = pneg %p49
        $region26: #{tpu_custom_call.1} parent=23 // pred_check_branch
          %194 = sbr.rel (%p192) target = $region28
        $region27: #{tpu_custom_call.1} parent=23 // pred_region
          %s195 = sand.u32 %s39, 1
          %s196 = scalar_lea.sflag [#allocation4], %s195
          %s197 = sand.u32 %s39, 1
          %s198 = smul.addr %s197, 8
          %s199 = scalar_lea.vmem [#allocation3], %s198
          %s200 = smul.u32 2, %s25
          %s202 = ssub.s32 128, 128
          %203 = vsyncadd %s196, %s202
          %s204 = smul.addr %s200, 64
          %s205 = scalar_lea.hbm %s0, %s204
          %s207 = sshll.u32 %s199, 4
          %s208 = int_to_ptr.vmem [resolvable:$true] %s207
          %210 = dma.hbm_to_vmem [thread:$0]  %s205, 128, %s208, %s196
        $region28: #{tpu_custom_call.1} parent=23 // pred_fallthru
          _
        // Predicated region
        $region29: #{tpu_custom_call.1} parent=23 // pred_check
          %p211 = pneg %p77
        $region30: #{tpu_custom_call.1} parent=23 // pred_check_branch
          %213 = sbr.rel (%p211) target = $region32
        $region31: #{tpu_custom_call.1} parent=23 // pred_region
          %s214 = sand.u32 %s67, 1
          %s215 = scalar_lea.sflag [#allocation7], %s214
          %s216 = sand.u32 %s67, 1
          %s217 = smul.addr %s216, 128
          %s218 = scalar_lea.vmem [#allocation6], %s217
          %s219 = smul.u32 32, %s25
          %s221 = ssub.s32 2048, 2048
          %222 = vsyncadd %s215, %s221
          %s223 = sadd.s32 %s24, %s219
          %s224 = smul.addr %s223, 64
          %s225 = scalar_lea.hbm %s1, %s224
          %s226 = sshll.u32 %s218, 4
          %s227 = int_to_ptr.vmem [resolvable:$true] %s226
          %232 = dma.hbm_to_vmem [thread:$0]  %s225, 2048, %s227, %s215, 64, 64, 4
        $region32: #{tpu_custom_call.1} parent=23 // pred_fallthru
          _
      $region24: #{tpu_custom_call.1} parent=5 // pred_fallthru
        _
      %p233 = scmp.le.s32.totalorder 1, %s17
      %p234 = scmp.lt.s32.totalorder %s17, 5
      %p235 = pnand %p233, %p234
      %p236 = pneg %p235
      // Predicated region
      $region33: #{tpu_custom_call.1} parent=5 // pred_check
        _
      $region34: #{tpu_custom_call.1} parent=5 // pred_check_branch
        %238 = sbr.rel (%p235) target = $region36
      $region35: #{tpu_custom_call.1} parent=5 // pred_region
        %s239 = ssub.s32 %s17, 1
        %s240 = sand.u32 %s42, 1
        %s241 = scalar_lea.sflag [#allocation4], %s240
        %s242 = sand.u32 %s42, 1
        %s243 = smul.addr %s242, 8
        %s244 = scalar_lea.vmem [#allocation3], %s243
        // Predicated region
        $region37: #{tpu_custom_call.1} parent=35 // pred_check
          %p245 = pneg %p55
        $region38: #{tpu_custom_call.1} parent=35 // pred_check_branch
          %247 = sbr.rel (%p245) target = $region40
        $region39: #{tpu_custom_call.1} parent=35 // pred_region
          %248 = dma.done %s241, 128
        $region40: #{tpu_custom_call.1} parent=35 // pred_fallthru
          _
        %s249 = sand.u32 %s70, 1
        %s250 = scalar_lea.sflag [#allocation7], %s249
        %s251 = sand.u32 %s70, 1
        %s252 = smul.addr %s251, 128
        %s253 = scalar_lea.vmem [#allocation6], %s252
        // Predicated region
        $region41: #{tpu_custom_call.1} parent=35 // pred_check
          %p254 = pneg %p83
        $region42: #{tpu_custom_call.1} parent=35 // pred_check_branch
          %256 = sbr.rel (%p254) target = $region44
        $region43: #{tpu_custom_call.1} parent=35 // pred_region
          %257 = dma.done %s250, 2048
        $region44: #{tpu_custom_call.1} parent=35 // pred_fallthru
          _
        %s258 = sand.u32 %s42, 1
        %s259 = scalar_lea.sflag [#allocation4], %s258
        %s260 = sand.u32 %s42, 1
        %s261 = smul.addr %s260, 8
        %s262 = scalar_lea.vmem [#allocation3], %s261
        %p263 = pneg %p55
        %p264 = pneg %p52
        %s265 = sand.u32 %s70, 1
        %s266 = scalar_lea.sflag [#allocation7], %s265
        %s267 = sand.u32 %s70, 1
        %s268 = smul.addr %s267, 128
        %s269 = scalar_lea.vmem [#allocation6], %s268
        %p270 = pneg %p83
        %p271 = pneg %p80
        %p272 = scmp.lt.s32.totalorder %s26, 0
        %s273 = scalar_select %p272, %s26, 0
        %s274 = scalar_lea.vmem %s2, %s273
        %p275 = pneg %p109
        %p276 = pneg %p106
        %p277 = scmp.lt.s32.totalorder %s26, 0
        %s278 = scalar_select %p277, %s26, 0
        %s279 = scalar_lea.vmem %s3, %s278
        %p280 = pneg %p135
        %p281 = pneg %p132
        %p282 = pneg %p161
        %p283 = pneg %p158
        %s284 = smul.u32 2, %s27
        %s285 = smul.u32 32, %s27
        %p286 = scmp.lt.s32.totalorder %s26, 0
        %s287 = scalar_select %p286, %s26, 0
        %s288 = scalar_lea.vmem %s2, %s287
        %p289 = scmp.lt.s32.totalorder %s26, 0
        %s290 = scalar_select %p289, %s26, 0
        %s291 = scalar_lea.vmem %s3, %s290
        %p293 = scmp.eq.s32.totalorder %s27, 0
        // Predicated region
        $region45: #{tpu_custom_call.1} parent=35 // pred_check
          %p294 = pneg %p293
        $region46: #{tpu_custom_call.1} parent=35 // pred_check_branch
          %296 = sbr.rel (%p294) target = $region48
        $region47: #{tpu_custom_call.1} parent=35 // pred_region
          %297 = vst [vmem:[#allocation2] sm:$0xff] 0.0
        $region48: #{tpu_custom_call.1} parent=35 // pred_fallthru
          _
        %v298 = vld [vmem:[#allocation2] sm:$0xff]
        %v299 = vld [vmem:[%s244] sm:$0xff]
        %v300 = vld [vmem:[%s253] sm:$0xf]
        %v301 = vld [vmem:[%s253 + $0x4] sm:$0xf]
        %v302 = vld [vmem:[%s253 + $0x8] sm:$0xf]
        %v303 = vld [vmem:[%s253 + $0xc] sm:$0xf]
        %v304 = vld [vmem:[%s253 + $0x10] sm:$0xf]
        %v305 = vld [vmem:[%s253 + $0x14] sm:$0xf]
        %v306 = vld [vmem:[%s253 + $0x18] sm:$0xf]
        %v307 = vld [vmem:[%s253 + $0x1c] sm:$0xf]
        %v308 = vld [vmem:[%s253 + $0x20] sm:$0xf]
        %v309 = vld [vmem:[%s253 + $0x24] sm:$0xf]
        %v310 = vld [vmem:[%s253 + $0x28] sm:$0xf]
        %v311 = vld [vmem:[%s253 + $0x2c] sm:$0xf]
        %v312 = vld [vmem:[%s253 + $0x30] sm:$0xf]
        %v313 = vld [vmem:[%s253 + $0x34] sm:$0xf]
        %v314 = vld [vmem:[%s253 + $0x38] sm:$0xf]
        %v315 = vld [vmem:[%s253 + $0x3c] sm:$0xf]
        %v316 = vld [vmem:[%s253 + $0x40] sm:$0xf]
        %v317 = vld [vmem:[%s253 + $0x44] sm:$0xf]
        %v318 = vld [vmem:[%s253 + $0x48] sm:$0xf]
        %v319 = vld [vmem:[%s253 + $0x4c] sm:$0xf]
        %v320 = vld [vmem:[%s253 + $0x50] sm:$0xf]
        %v321 = vld [vmem:[%s253 + $0x54] sm:$0xf]
        %v322 = vld [vmem:[%s253 + $0x58] sm:$0xf]
        %v323 = vld [vmem:[%s253 + $0x5c] sm:$0xf]
        %v324 = vld [vmem:[%s253 + $0x60] sm:$0xf]
        %v325 = vld [vmem:[%s253 + $0x64] sm:$0xf]
        %v326 = vld [vmem:[%s253 + $0x68] sm:$0xf]
        %v327 = vld [vmem:[%s253 + $0x6c] sm:$0xf]
        %v328 = vld [vmem:[%s253 + $0x70] sm:$0xf]
        %v329 = vld [vmem:[%s253 + $0x74] sm:$0xf]
        %v330 = vld [vmem:[%s253 + $0x78] sm:$0xf]
        %v331 = vld [vmem:[%s253 + $0x7c] sm:$0xf]
        %v333 = vunpack.c.l.b16 %v299
        %v334 = vunpack.c.h.b16 %v299
        %v335 = vpack.c.b16 %v333, %v333
        %v336 = vpack.c.b16 %v334, %v334
        %v371 = vunpack.c.l.b16 %v300
        %v372 = vunpack.c.l.b16 %v301
        %v373 = vunpack.c.l.b16 %v302
        %v374 = vunpack.c.l.b16 %v303
        %v375 = vunpack.c.l.b16 %v304
        %v376 = vunpack.c.l.b16 %v305
        %v377 = vunpack.c.l.b16 %v306
        %v378 = vunpack.c.l.b16 %v307
        %v379 = vunpack.c.l.b16 %v308
        %v380 = vunpack.c.l.b16 %v309
        %v381 = vunpack.c.l.b16 %v310
        %v382 = vunpack.c.l.b16 %v311
        %v383 = vunpack.c.l.b16 %v312
        %v384 = vunpack.c.l.b16 %v313
        %v385 = vunpack.c.l.b16 %v314
        %v386 = vunpack.c.l.b16 %v315
        %v387 = vunpack.c.l.b16 %v316
        %v388 = vunpack.c.l.b16 %v317
        %v389 = vunpack.c.l.b16 %v318
        %v390 = vunpack.c.l.b16 %v319
        %v391 = vunpack.c.l.b16 %v320
        %v392 = vunpack.c.l.b16 %v321
        %v393 = vunpack.c.l.b16 %v322
        %v394 = vunpack.c.l.b16 %v323
        %v395 = vunpack.c.l.b16 %v324
        %v396 = vunpack.c.l.b16 %v325
        %v397 = vunpack.c.l.b16 %v326
        %v398 = vunpack.c.l.b16 %v327
        %v399 = vunpack.c.l.b16 %v328
        %v400 = vunpack.c.l.b16 %v329
        %v401 = vunpack.c.l.b16 %v330
        %v402 = vunpack.c.l.b16 %v331
        %v403 = vpack.c.b16 %v372, %v371
        %v404 = vpack.c.b16 %v374, %v373
        %v405 = vpack.c.b16 %v376, %v375
        %v406 = vpack.c.b16 %v378, %v377
        %v407 = vpack.c.b16 %v380, %v379
        %v408 = vpack.c.b16 %v382, %v381
        %v409 = vpack.c.b16 %v384, %v383
        %v410 = vpack.c.b16 %v386, %v385
        %v411 = vpack.c.b16 %v388, %v387
        %v412 = vpack.c.b16 %v390, %v389
        %v413 = vpack.c.b16 %v392, %v391
        %v414 = vpack.c.b16 %v394, %v393
        %v415 = vpack.c.b16 %v396, %v395
        %v416 = vpack.c.b16 %v398, %v397
        %v417 = vpack.c.b16 %v400, %v399
        %v418 = vpack.c.b16 %v402, %v401
        %435 = vmatprep.subr.bf16.mxu0 0
        %436 = vmatpush1.bf16.msra.mxu0 %v403
        %437 = vmatprep.subr.bf16.mxu0 0
        %438 = vmatpush1.bf16.msra.mxu0 %v404
        %439 = vmatprep.subr.bf16.mxu0 0
        %440 = vmatpush1.bf16.msra.mxu0 %v405
        %441 = vmatprep.subr.bf16.mxu0 0
        %442 = vmatpush1.bf16.msra.mxu0 %v406
        %443 = vmatprep.subr.bf16.mxu0 0
        %444 = vmatpush1.bf16.msra.mxu0 %v407
        %445 = vmatprep.subr.bf16.mxu0 0
        %446 = vmatpush1.bf16.msra.mxu0 %v408
        %447 = vmatprep.subr.bf16.mxu0 0
        %448 = vmatpush1.bf16.msra.mxu0 %v409
        %449 = vmatprep.subr.bf16.mxu0 0
        %450 = vmatpush1.bf16.msra.mxu0 %v410
        %451 = vmatprep.subr.bf16.mxu0 0
        %452 = vmatpush1.bf16.msra.mxu0 %v411
        %453 = vmatprep.subr.bf16.mxu0 0
        %454 = vmatpush1.bf16.msra.mxu0 %v412
        %455 = vmatprep.subr.bf16.mxu0 0
        %456 = vmatpush1.bf16.msra.mxu0 %v413
        %457 = vmatprep.subr.bf16.mxu0 0
        %458 = vmatpush1.bf16.msra.mxu0 %v414
        %459 = vmatprep.subr.bf16.mxu0 0
        %460 = vmatpush1.bf16.msra.mxu0 %v415
        %461 = vmatprep.subr.bf16.mxu0 0
        %462 = vmatpush1.bf16.msra.mxu0 %v416
        %463 = vmatprep.subr.bf16.mxu0 0
        %464 = vmatpush1.bf16.msra.mxu0 %v417
        %465 = vmatprep.subr.bf16.mxu0 0
        %466 = vmatpush1.bf16.msra.mxu0 %v418
        %467 = vmatprep.mubr.bf16.mxu0 %v336
        %468 = vmatmul.mubr.bf16.gmra.mrb[0].mxu0 %v335
        %v469 = vpop.f32.mrb[0].mxu0
        %v470 = vadd.f32 0.0, %v469
        %v471 = vpop.f32.mrb[0].mxu0
        %v472 = vpop.f32.mrb[0].mxu0
        %v473 = vpop.f32.mrb[0].mxu0
        %474 = vdwg.mxu0
        %v475 = vadd.f32 %v298, %v470
        %476 = vst [vmem:[#allocation2] sm:$0xff] %v475
        %p477 = scmp.eq.s32.totalorder %s27, 3
        // Predicated region
        $region49: #{tpu_custom_call.1} parent=35 // pred_check
          %p478 = pneg %p477
        $region50: #{tpu_custom_call.1} parent=35 // pred_check_branch
          %480 = sbr.rel (%p478) target = $region52
        $region51: #{tpu_custom_call.1} parent=35 // pred_region
          %v481 = vld [vmem:[#allocation2] sm:$0xff]
          %v482 = vlaneseq
          %v483 = vshrl.u32 %v482, 7
          %vm484 = vcmp.lt.s32.totalorder %v483, 2
          %v485 = vsel %vm484, 1, 0
          %v486 = vcvt.s32.f32 %v485
          %v487 = vrot.slane %v481, 4
          %v488 = vadd.f32 %v481, %v487
          %v489 = vrot.slane %v488, 2
          %v490 = vadd.f32 %v488, %v489
          %v491 = vrot.slane %v490, 1
          %v492 = vadd.f32 %v490, %v491
          %v493 = vmul.f32 %v492, 0.5
          %v494 = vsub.f32 %v481, %v493
          %v495 = vmul.f32 %v494, %v486
          %v496 = vmul.f32 %v495, %v495
          %v497 = vrot.slane %v496, 4
          %v498 = vadd.f32 %v496, %v497
          %v499 = vrot.slane %v498, 2
          %v500 = vadd.f32 %v498, %v499
          %v501 = vrot.slane %v500, 1
          %v502 = vadd.f32 %v500, %v501
          %v503 = vmul.f32 %v502, 0.5
          %v504 = vld [vmem:[%s288] sm:$0x1]
          %v505 = vadd.f32 %v503, 1e-05
          %v506 = vrsqrt.pop %v505
          %v507 = vmul.f32 %v504, %v506
          %v509 = vlaneseq
          %v510 = vshrl.u32 %v509, 7
          %v511 = vsub.s32 0, %v510
          %v512 = vrot.slane %v507, %v511
          %v514 = vmul.f32 %v495, %v512
          %v515 = vld [vmem:[%s291] sm:$0x1]
          %v517 = vlaneseq
          %v518 = vshrl.u32 %v517, 7
          %v519 = vsub.s32 0, %v518
          %v520 = vrot.slane %v515, %v519
          %v522 = vadd.f32 %v514, %v520
          %v523 = vmax.f32 %v522, 0.0
          %524 = vst [vmem:[#allocation8] sm:$0xff] %v523
        $region52: #{tpu_custom_call.1} parent=35 // pred_fallthru
          _
        // Predicated region
        $region53: #{tpu_custom_call.1} parent=35 // pred_check
          %p525 = pneg %p158
        $region54: #{tpu_custom_call.1} parent=35 // pred_check_branch
          %527 = sbr.rel (%p525) target = $region56
        $region55: #{tpu_custom_call.1} parent=35 // pred_region
          %s529 = ssub.s32 128, 128
          %530 = vsyncadd [#allocation5], %s529
          %s531 = smul.addr %s26, 128
          %s532 = scalar_lea.hbm %s4, %s531
          %s534 = sshll.u32 [#allocation8], 4
          %s535 = int_to_ptr.vmem [resolvable:$true] %s534
          %537 = dma.vmem_to_hbm [thread:$0]  %s535, 128, %s532, [#allocation5]
        $region56: #{tpu_custom_call.1} parent=35 // pred_fallthru
          _
        // Predicated region
        $region57: #{tpu_custom_call.1} parent=35 // pred_check
          %p538 = pneg %p158
        $region58: #{tpu_custom_call.1} parent=35 // pred_check_branch
          %540 = sbr.rel (%p538) target = $region60
        $region59: #{tpu_custom_call.1} parent=35 // pred_region
          %541 = dma.done [#allocation5], 128
        $region60: #{tpu_custom_call.1} parent=35 // pred_fallthru
          _
      $region36: #{tpu_custom_call.1} parent=5 // pred_fallthru
        _
      %p542 = scmp.le.s32.totalorder 2, %s17
      // Predicated region
      $region61: #{tpu_custom_call.1} parent=5 // pred_check
        %p543 = pneg %p542
      $region62: #{tpu_custom_call.1} parent=5 // pred_check_branch
        %545 = sbr.rel (%p543) target = $region64
      $region63: #{tpu_custom_call.1} parent=5 // pred_region
        %s546 = ssub.s32 %s17, 2
      $region64: #{tpu_custom_call.1} parent=5 // pred_fallthru
        _
    $region6: #{tpu_custom_call.1} parent=1 // loop_footer
      %s21 = sadd.s32 1, %s17
    $region7: #{tpu_custom_call.1} parent=1 // loop_footer_branch
      %16 = sbr.rel target = $region3
    $region8: #{tpu_custom_call.1} parent=1 // loop_exit
      _
    %547 = vsyncpa [#allocation4], 1
    %s548 = scalar_lea.sflag [#allocation4], 1
    %549 = vsyncpa %s548, 1
    %550 = vsyncpa [#allocation7], 1
    %s551 = scalar_lea.sflag [#allocation7], 1
    %552 = vsyncpa %s551, 1
    %553 = vsyncpa [#allocation5], 1
    %s554 = scalar_lea.sflag [#allocation5], 1
    %555 = vsyncpa %s554, 1

</llo_original>
